<compile_context>
chip_gen: v7x
topology: tpu7x:2x2x1
jax: 0.10.0
libtpu: 0.0.40
codegen_flags: <defaults>
</compile_context>

<pallas_src>
import functools

import jax
import jax.numpy as jnp
import numpy as np
from jax.experimental import pallas as pl
from jax.experimental.pallas import tpu as pltpu


def _fft2_kernel(x_ref, fd_cat_ref, fd_swp_ref, fs_re_ref, fs_im_ref, out_ref):
    x = x_ref[...]                                                 # (S, B*D)

    # Stage 1: D-point FFT per (s, batch); batch lives in lanes, so the fused
    # re/im twiddles are batch-block-diagonal on the right. N = B*2D = 128.
    y_cat = jnp.dot(x, fd_cat_ref[...],
                    preferred_element_type=jnp.float32)            # [ Y_re | Y_im ] per batch
    y_swp = jnp.dot(x, fd_swp_ref[...],
                    preferred_element_type=jnp.float32)            # [-Y_im | Y_re ] per batch

    # Stage 2: S-point FFT from the left as two accumulating MXU dots
    # (no concatenate, no VMEM round-trip of a stacked operand):
    #   [Z_re | Z_im] = Fs_re @ [Y_re | Y_im] + Fs_im @ [-Y_im | Y_re]
    out_ref[...] = (
        jnp.dot(fs_re_ref[...], y_cat, preferred_element_type=jnp.float32)
        + jnp.dot(fs_im_ref[...], y_swp, preferred_element_type=jnp.float32)
    )                                                              # (S, B*2D) lane-dense


def _dft_matrix(n):
    # W[j, k] = exp(-2*pi*i*j*k/n)  (torch.fft.fft convention, no normalization)
    j = np.arange(n)
    ang = -2.0 * np.pi * np.outer(j, j) / n
    return np.cos(ang).astype(np.float32), np.sin(ang).astype(np.float32)


@functools.lru_cache(maxsize=None)
def _twiddles(B, S, D):
    """Host-side fused twiddles, built + uploaded once per (B, S, D)."""
    fd_re, fd_im = _dft_matrix(D)
    fs_re, fs_im = _dft_matrix(S)
    fd_cat = np.concatenate([fd_re, fd_im], axis=1)                # (D, 2D)
    fd_swp = np.concatenate([-fd_im, fd_re], axis=1)               # (D, 2D)
    eye_b = np.eye(B, dtype=np.float32)
    # Batch-block-diagonal stage-1 twiddles (batch-in-lanes layout). Small:
    # (B*D, B*2D) = (64, 128) at the reference shape.
    fd_cat_bd = np.kron(eye_b, fd_cat)                             # (B*D, B*2D)
    fd_swp_bd = np.kron(eye_b, fd_swp)                             # (B*D, B*2D)
    return (jnp.asarray(fd_cat_bd), jnp.asarray(fd_swp_bd),
            jnp.asarray(fs_re), jnp.asarray(fs_im))


def attention_layer_fft2(x):
    """Equivalent of AttentionLayer.forward: fft over dim=-1 then dim=-2.

    x: real (B, S, D) float32. Returns (re, im), each (B, S, D) float32.
    """
    B, S, D = x.shape
    fd_cat_bd, fd_swp_bd, fs_re, fs_im = _twiddles(B, S, D)

    # Batch into the lane axis: (B, S, D) -> (S, B*D).
    x_t = jnp.transpose(x, (1, 0, 2)).reshape(S, B * D)

    out = pl.pallas_call(
        _fft2_kernel,
        out_shape=jax.ShapeDtypeStruct((S, 2 * B * D), jnp.float32),
        grid=(1,),  # single step; for large B, shard a leading batch axis as "parallel" (v7x 2 TCs)
        in_specs=[
            pl.BlockSpec((S, B * D), lambda i: (0, 0)),            # x_t         (8, 64)
            pl.BlockSpec((B * D, 2 * B * D), lambda i: (0, 0)),    # Fd_cat_bd   (64, 128)
            pl.BlockSpec((B * D, 2 * B * D), lambda i: (0, 0)),    # Fd_swp_bd   (64, 128)
            pl.BlockSpec((S, S), lambda i: (0, 0)),                # Fs_re       (8, 8)
            pl.BlockSpec((S, S), lambda i: (0, 0)),                # Fs_im       (8, 8)
        ],
        out_specs=pl.BlockSpec((S, 2 * B * D), lambda i: (0, 0)),  # (8, 128) lane-dense
        compiler_params=pltpu.CompilerParams(
            dimension_semantics=("arbitrary",)),
    )(x_t, fd_cat_bd, fd_swp_bd, fs_re, fs_im)

    # Unpack (S, B*2D) -> (B, S, D) re/im (tiny wrapper-side copies).
    out = jnp.transpose(out.reshape(S, B, 2 * D), (1, 0, 2))       # (B, S, 2D)
    return out[..., :D], out[..., D:]


if __name__ == "__main__":
    # AttentionLayer(d_embed=32); input (batch=2, seq=8, d_embed=32)
    B, S, D = 2, 8, 32
    key = jax.random.PRNGKey(0)
    x = jax.random.normal(key, (B, S, D), dtype=jnp.float32)

    out_re, out_im = attention_layer_fft2(x)
    out_re = jax.block_until_ready(out_re)
    out_im = jax.block_until_ready(out_im)

    # Reference: fft over dim=-1 then dim=-2 (same as torch.fft.fft nesting).
    ref = jnp.fft.fft(jnp.fft.fft(x.astype(jnp.complex64), axis=-1), axis=-2)
    assert jnp.allclose(out_re, jnp.real(ref), atol=1e-3, rtol=1e-3)
    assert jnp.allclose(out_im, jnp.imag(ref), atol=1e-3, rtol=1e-3)

    print("KERNEL_OK")
</pallas_src>

<mosaic_0001>
module attributes {stable_mosaic.version = 11 : i64} {
  func.func @_fft2_kernel(%arg0: i32, %arg1: memref<8x64xf32, #tpu.memory_space<vmem>>, %arg2: memref<64x128xf32, #tpu.memory_space<vmem>>, %arg3: memref<64x128xf32, #tpu.memory_space<vmem>>, %arg4: memref<8x8xf32, #tpu.memory_space<vmem>>, %arg5: memref<8x8xf32, #tpu.memory_space<vmem>>, %arg6: memref<8x128xf32, #tpu.memory_space<vmem>>) attributes {dimension_semantics = [#tpu.dimension_semantics<arbitrary>], iteration_bounds = array<i64: 1>, scalar_prefetch = 0 : i64, scratch_operands = 0 : i64, tpu.core_type = #tpu.core_type<tc>, window_params = [{pipeline_mode = #tpu.pipeline_mode<synchronous>, transform_indices = @transform_0, window_bounds = array<i64: 8, 64>}, {pipeline_mode = #tpu.pipeline_mode<synchronous>, transform_indices = @transform_1, window_bounds = array<i64: 64, 128>}, {pipeline_mode = #tpu.pipeline_mode<synchronous>, transform_indices = @transform_2, window_bounds = array<i64: 64, 128>}, {pipeline_mode = #tpu.pipeline_mode<synchronous>, transform_indices = @transform_3, window_bounds = array<i64: 8, 8>}, {pipeline_mode = #tpu.pipeline_mode<synchronous>, transform_indices = @transform_4, window_bounds = array<i64: 8, 8>}, {pipeline_mode = #tpu.pipeline_mode<synchronous>, transform_indices = @transform_5, window_bounds = array<i64: 8, 128>}]} {
    %c0 = arith.constant 0 : index
    %c0_0 = arith.constant 0 : index
    %0 = vector.load %arg1[%c0, %c0_0] : memref<8x64xf32, #tpu.memory_space<vmem>>, vector<8x64xf32>
    %c0_1 = arith.constant 0 : index
    %c0_2 = arith.constant 0 : index
    %1 = vector.load %arg2[%c0_1, %c0_2] : memref<64x128xf32, #tpu.memory_space<vmem>>, vector<64x128xf32>
    %cst = arith.constant dense<0.000000e+00> : vector<8x128xf32>
    %2 = tpu.matmul %0, %1, %cst {dimension_numbers = #tpu.dot_dimension_numbers<[1], [0], [0], [1], [0, 0, 1, 1], [], []>} : vector<8x64xf32>, vector<64x128xf32>, vector<8x128xf32> -> vector<8x128xf32>
    %c0_3 = arith.constant 0 : index
    %c0_4 = arith.constant 0 : index
    %3 = vector.load %arg3[%c0_3, %c0_4] : memref<64x128xf32, #tpu.memory_space<vmem>>, vector<64x128xf32>
    %cst_5 = arith.constant dense<0.000000e+00> : vector<8x128xf32>
    %4 = tpu.matmul %0, %3, %cst_5 {dimension_numbers = #tpu.dot_dimension_numbers<[1], [0], [0], [1], [0, 0, 1, 1], [], []>} : vector<8x64xf32>, vector<64x128xf32>, vector<8x128xf32> -> vector<8x128xf32>
    %c0_6 = arith.constant 0 : index
    %c0_7 = arith.constant 0 : index
    %5 = vector.load %arg4[%c0_6, %c0_7] : memref<8x8xf32, #tpu.memory_space<vmem>>, vector<8x8xf32>
    %cst_8 = arith.constant dense<0.000000e+00> : vector<8x128xf32>
    %6 = tpu.matmul %5, %2, %cst_8 {dimension_numbers = #tpu.dot_dimension_numbers<[1], [0], [0], [1], [0, 0, 1, 1], [], []>} : vector<8x8xf32>, vector<8x128xf32>, vector<8x128xf32> -> vector<8x128xf32>
    %c0_9 = arith.constant 0 : index
    %c0_10 = arith.constant 0 : index
    %7 = vector.load %arg5[%c0_9, %c0_10] : memref<8x8xf32, #tpu.memory_space<vmem>>, vector<8x8xf32>
    %cst_11 = arith.constant dense<0.000000e+00> : vector<8x128xf32>
    %8 = tpu.matmul %7, %4, %cst_11 {dimension_numbers = #tpu.dot_dimension_numbers<[1], [0], [0], [1], [0, 0, 1, 1], [], []>} : vector<8x8xf32>, vector<8x128xf32>, vector<8x128xf32> -> vector<8x128xf32>
    %9 = arith.addf %6, %8 : vector<8x128xf32>
    %c0_12 = arith.constant 0 : index
    %c0_13 = arith.constant 0 : index
    %10 = vector.load %arg6[%c0_12, %c0_13] : memref<8x128xf32, #tpu.memory_space<vmem>>, vector<8x128xf32>
    tpu.vector_store %arg6[%c0_12, %c0_13], %9 {strides = array<i32>} : memref<8x128xf32, #tpu.memory_space<vmem>>, vector<8x128xf32>,
    return
  }
  func.func @transform_0(%arg0: i32) -> (i32, i32) {
    %c0_i32 = arith.constant 0 : i32
    %c0_i32_0 = arith.constant 0 : i32
    %c0_i32_1 = arith.constant 0 : i32
    return %c0_i32, %c0_i32_0 : i32, i32
  }
  func.func @transform_1(%arg0: i32) -> (i32, i32) {
    %c0_i32 = arith.constant 0 : i32
    %c0_i32_0 = arith.constant 0 : i32
    %c0_i32_1 = arith.constant 0 : i32
    return %c0_i32, %c0_i32_0 : i32, i32
  }
  func.func @transform_2(%arg0: i32) -> (i32, i32) {
    %c0_i32 = arith.constant 0 : i32
    %c0_i32_0 = arith.constant 0 : i32
    %c0_i32_1 = arith.constant 0 : i32
    return %c0_i32, %c0_i32_0 : i32, i32
  }
  func.func @transform_3(%arg0: i32) -> (i32, i32) {
    %c0_i32 = arith.constant 0 : i32
    %c0_i32_0 = arith.constant 0 : i32
    %c0_i32_1 = arith.constant 0 : i32
    return %c0_i32, %c0_i32_0 : i32, i32
  }
  func.func @transform_4(%arg0: i32) -> (i32, i32) {
    %c0_i32 = arith.constant 0 : i32
    %c0_i32_0 = arith.constant 0 : i32
    %c0_i32_1 = arith.constant 0 : i32
    return %c0_i32, %c0_i32_0 : i32, i32
  }
  func.func @transform_5(%arg0: i32) -> (i32, i32) {
    %c0_i32 = arith.constant 0 : i32
    %c0_i32_0 = arith.constant 0 : i32
    %c0_i32_1 = arith.constant 0 : i32
    return %c0_i32, %c0_i32_0 : i32, i32
  }
}

</mosaic_0001>

<llo_original>
// kernel: tpu_custom_call.1
$region0: #{tpu_custom_call.1}
  #allocation0 [shape = 'u32[]', space=smem, size = 0x4, offset = 0x4, fixed_abs, tag = 'smem constant byte address 0x4 - core index']
  #allocation1 [shape = 'u32[144,128]{1,0:T(1,128)}', space=vmem, size = 0x12000, scoped, tag = 'internal scratch']
  %s0 = inlined_call_operand.hbm [shape: f32[8,64], index: 0, kind: input, shape index: {}]
  %s1 = inlined_call_operand.hbm [shape: f32[64,128], index: 1, kind: input, shape index: {}]
  %s2 = inlined_call_operand.hbm [shape: f32[64,128], index: 2, kind: input, shape index: {}]
  %s3 = inlined_call_operand.vmem [shape: f32[8,8], index: 3, kind: input, shape index: {}]
  %s4 = inlined_call_operand.hbm [shape: f32[8,8], index: 4, kind: input, shape index: {}]
  %s5 = inlined_call_operand.hbm [shape: f32[8,128], index: 5, kind: output, shape index: {}]
  %s6 = sld [smem:[#allocation0]]
  $region46: #{tpu_custom_call.1} parent=0
    _
  %s8 = ssub.s32 1, %s6
  %s9 = scalar_select 0, %s8, %s6
  $region1: #{tpu_custom_call.1} parent=0
    #allocation2 [shape = 'u8[4096]{0}', space=vmem, size = 0x1000, scoped, tag = 'input window, operand 0, single buffered']
    #allocation3 [shape = 's32[1]{0}', space=sflag, size = 0x4, scoped, tag = 'scoped memory for tpu_custom_call.1']
    #allocation4 [shape = 's32[1]{0}', space=sflag, size = 0x4, scoped, tag = 'scoped memory for tpu_custom_call.1']
    #allocation5 [shape = 'u8[32768]{0}', space=vmem, size = 0x8000, scoped, tag = 'input window, operand 1, single buffered']
    #allocation6 [shape = 's32[1]{0}', space=sflag, size = 0x4, scoped, tag = 'scoped memory for tpu_custom_call.1']
    #allocation7 [shape = 'u8[32768]{0}', space=vmem, size = 0x8000, scoped, tag = 'input window, operand 2, single buffered']
    #allocation8 [shape = 'u8[4096]{0}', space=vmem, size = 0x1000, scoped, tag = 'input window, operand 4, single buffered']
    #allocation9 [shape = 's32[1]{0}', space=sflag, size = 0x4, scoped, tag = 'scoped memory for tpu_custom_call.1']
    #allocation10 [shape = 'u8[4096]{0}', space=vmem, size = 0x1000, scoped, tag = 'output window, operand 0, single buffered']
    %10 = vsyncpa [#allocation3], 0
    %11 = vsyncpa [#allocation6], 0
    %12 = vsyncpa [#allocation9], 0
    %13 = vsyncpa [#allocation4], 0
    // Predicated region
    $region2: #{tpu_custom_call.1} parent=1 // pred_check
      _
    $region3: #{tpu_custom_call.1} parent=1 // pred_check_branch
      %15 = sbr.rel (0) target = $region5
    $region4: #{tpu_custom_call.1} parent=1 // pred_region
      %s17 = ssub.s32 128, 128
      %18 = vsyncadd [#allocation3], %s17
      %s20 = sshll.u32 [#allocation2], 4
      %s21 = int_to_ptr.vmem [resolvable:$true] %s20
      %23 = dma.hbm_to_vmem [thread:$0]  %s0, 128, %s21, [#allocation3]
    $region5: #{tpu_custom_call.1} parent=1 // pred_fallthru
      _
    // Predicated region
    $region6: #{tpu_custom_call.1} parent=1 // pred_check
      _
    $region7: #{tpu_custom_call.1} parent=1 // pred_check_branch
      %25 = sbr.rel (0) target = $region9
    $region8: #{tpu_custom_call.1} parent=1 // pred_region
      %s27 = ssub.s32 1024, 1024
      %28 = vsyncadd [#allocation6], %s27
      %s29 = sshll.u32 [#allocation5], 4
      %s30 = int_to_ptr.vmem [resolvable:$true] %s29
      %35 = dma.hbm_to_vmem [thread:$0]  %s1, 1024, %s30, [#allocation6], 128, 128, 8
    $region9: #{tpu_custom_call.1} parent=1 // pred_fallthru
      _
    // Predicated region
    $region10: #{tpu_custom_call.1} parent=1 // pred_check
      _
    $region11: #{tpu_custom_call.1} parent=1 // pred_check_branch
      %37 = sbr.rel (0) target = $region13
    $region12: #{tpu_custom_call.1} parent=1 // pred_region
      %s39 = ssub.s32 1024, 1024
      %40 = vsyncadd [#allocation6], %s39
      %s41 = sshll.u32 [#allocation7], 4
      %s42 = int_to_ptr.vmem [resolvable:$true] %s41
      %47 = dma.hbm_to_vmem [thread:$0]  %s2, 1024, %s42, [#allocation6], 128, 128, 8
    $region13: #{tpu_custom_call.1} parent=1 // pred_fallthru
      _
    // Predicated region
    $region14: #{tpu_custom_call.1} parent=1 // pred_check
      _
    $region15: #{tpu_custom_call.1} parent=1 // pred_check_branch
      %49 = sbr.rel (0) target = $region17
    $region16: #{tpu_custom_call.1} parent=1 // pred_region
      _
    $region17: #{tpu_custom_call.1} parent=1 // pred_fallthru
      _
    // Predicated region
    $region18: #{tpu_custom_call.1} parent=1 // pred_check
      _
    $region19: #{tpu_custom_call.1} parent=1 // pred_check_branch
      %51 = sbr.rel (0) target = $region21
    $region20: #{tpu_custom_call.1} parent=1 // pred_region
      %s53 = ssub.s32 128, 128
      %54 = vsyncadd [#allocation9], %s53
      %s56 = sshll.u32 [#allocation8], 4
      %s57 = int_to_ptr.vmem [resolvable:$true] %s56
      %59 = dma.hbm_to_vmem [thread:$0]  %s4, 128, %s57, [#allocation9]
    $region21: #{tpu_custom_call.1} parent=1 // pred_fallthru
      _
    // Predicated region
    $region22: #{tpu_custom_call.1} parent=1 // pred_check
      _
    $region23: #{tpu_custom_call.1} parent=1 // pred_check_branch
      %61 = sbr.rel (0) target = $region25
    $region24: #{tpu_custom_call.1} parent=1 // pred_region
      %62 = dma.done [#allocation3], 128
    $region25: #{tpu_custom_call.1} parent=1 // pred_fallthru
      _
    // Predicated region
    $region26: #{tpu_custom_call.1} parent=1 // pred_check
      _
    $region27: #{tpu_custom_call.1} parent=1 // pred_check_branch
      %64 = sbr.rel (0) target = $region29
    $region28: #{tpu_custom_call.1} parent=1 // pred_region
      %65 = dma.done [#allocation6], 1024
    $region29: #{tpu_custom_call.1} parent=1 // pred_fallthru
      _
    // Predicated region
    $region30: #{tpu_custom_call.1} parent=1 // pred_check
      _
    $region31: #{tpu_custom_call.1} parent=1 // pred_check_branch
      %67 = sbr.rel (0) target = $region33
    $region32: #{tpu_custom_call.1} parent=1 // pred_region
      %68 = dma.done [#allocation6], 1024
    $region33: #{tpu_custom_call.1} parent=1 // pred_fallthru
      _
    // Predicated region
    $region34: #{tpu_custom_call.1} parent=1 // pred_check
      _
    $region35: #{tpu_custom_call.1} parent=1 // pred_check_branch
      %70 = sbr.rel (0) target = $region37
    $region36: #{tpu_custom_call.1} parent=1 // pred_region
      %71 = dma.done [#allocation9], 128
    $region37: #{tpu_custom_call.1} parent=1 // pred_fallthru
      _
    %v72 = vld [vmem:[#allocation2] sm:$0xff]
    %v73 = vld [vmem:[#allocation5] sm:$0xff]
    %v74 = vld [vmem:[#allocation5 + $0x8] sm:$0xff]
    %v75 = vld [vmem:[#allocation5 + $0x10] sm:$0xff]
    %v76 = vld [vmem:[#allocation5 + $0x18] sm:$0xff]
    %v77 = vld [vmem:[#allocation5 + $0x20] sm:$0xff]
    %v78 = vld [vmem:[#allocation5 + $0x28] sm:$0xff]
    %v79 = vld [vmem:[#allocation5 + $0x30] sm:$0xff]
    %v80 = vld [vmem:[#allocation5 + $0x38] sm:$0xff]
    %vm81 = vcmask 523264
    %v83 = vsel %vm81, %v72, 0
    %85 = vmatprep.subr.mxu0 0.0
    %86 = vmatpush1.msra.mxu0 %v73
    %87 = vmatprep.subr.mxu0 0.0
    %88 = vmatpush1.msra.mxu0 %v74
    %89 = vmatprep.subr.mxu0 0.0
    %90 = vmatpush1.msra.mxu0 %v75
    %91 = vmatprep.subr.mxu0 0.0
    %92 = vmatpush1.msra.mxu0 %v76
    %93 = vmatprep.subr.mxu0 0.0
    %94 = vmatpush1.msra.mxu0 %v77
    %95 = vmatprep.subr.mxu0 0.0
    %96 = vmatpush1.msra.mxu0 %v78
    %97 = vmatprep.subr.mxu0 0.0
    %98 = vmatpush1.msra.mxu0 %v79
    %99 = vmatprep.subr.mxu0 0.0
    %100 = vmatpush1.msra.mxu0 %v80
    %101 = vmatprep.subr.mxu0 0.0
    %102 = vmatpush1.msra.mxu0 0.0
    %103 = vmatprep.subr.mxu0 0.0
    %104 = vmatpush1.msra.mxu0 0.0
    %105 = vmatprep.subr.mxu0 0.0
    %106 = vmatpush1.msra.mxu0 0.0
    %107 = vmatprep.subr.mxu0 0.0
    %108 = vmatpush1.msra.mxu0 0.0
    %109 = vmatprep.subr.mxu0 0.0
    %110 = vmatpush1.msra.mxu0 0.0
    %111 = vmatprep.subr.mxu0 0.0
    %112 = vmatpush1.msra.mxu0 0.0
    %113 = vmatprep.subr.mxu0 0.0
    %114 = vmatpush1.msra.mxu0 0.0
    %115 = vmatprep.subr.mxu0 0.0
    %116 = vmatpush1.msra.mxu0 0.0
    %117 = vmatprep.subr.mxu0 0.0
    %118 = vmatpush1.msra.mxu0 0.0
    %119 = vmatprep.subr.mxu0 0.0
    %120 = vmatpush1.msra.mxu0 0.0
    %121 = vmatprep.subr.mxu0 0.0
    %122 = vmatpush1.msra.mxu0 0.0
    %123 = vmatprep.subr.mxu0 0.0
    %124 = vmatpush1.msra.mxu0 0.0
    %125 = vmatprep.subr.mxu0 0.0
    %126 = vmatpush1.msra.mxu0 0.0
    %127 = vmatprep.subr.mxu0 0.0
    %128 = vmatpush1.msra.mxu0 0.0
    %129 = vmatprep.subr.mxu0 0.0
    %130 = vmatpush1.msra.mxu0 0.0
    %131 = vmatprep.subr.mxu0 0.0
    %132 = vmatpush1.msra.mxu0 0.0
    %133 = vmatprep.subr.mxu0 0.0
    %134 = vmatpush1.msra.mxu0 0.0
    %135 = vmatprep.subr.mxu0 0.0
    %136 = vmatpush1.msra.mxu0 0.0
    %137 = vmatprep.subr.mxu0 0.0
    %138 = vmatpush1.msra.mxu0 0.0
    %139 = vmatprep.subr.mxu0 0.0
    %140 = vmatpush1.msra.mxu0 0.0
    %141 = vmatprep.subr.mxu0 0.0
    %142 = vmatpush1.msra.mxu0 0.0
    %143 = vmatprep.subr.mxu0 0.0
    %144 = vmatpush1.msra.mxu0 0.0
    %145 = vmatprep.subr.mxu0 0.0
    %146 = vmatpush1.msra.mxu0 0.0
    %147 = vmatprep.subr.mxu0 0.0
    %148 = vmatpush1.msra.mxu0 0.0
    %149 = vmatprep.mubr.f32.mxu0 0.0
    %150 = vmatmul.mubr.f32.gmra.mrb[0].mxu0 %v83
    %v151 = vpop.f32.mrb[0].mxu0
    %v152 = vadd.f32 0.0, %v151
    %v153 = vpop.f32.mrb[0].mxu0
    %154 = vdwg.mxu0
    %v155 = vld [vmem:[#allocation7] sm:$0xff]
    %v156 = vld [vmem:[#allocation7 + $0x8] sm:$0xff]
    %v157 = vld [vmem:[#allocation7 + $0x10] sm:$0xff]
    %v158 = vld [vmem:[#allocation7 + $0x18] sm:$0xff]
    %v159 = vld [vmem:[#allocation7 + $0x20] sm:$0xff]
    %v160 = vld [vmem:[#allocation7 + $0x28] sm:$0xff]
    %v161 = vld [vmem:[#allocation7 + $0x30] sm:$0xff]
    %v162 = vld [vmem:[#allocation7 + $0x38] sm:$0xff]
    %163 = vmatprep.subr.mxu0 0.0
    %164 = vmatpush1.msra.mxu0 %v155
    %165 = vmatprep.subr.mxu0 0.0
    %166 = vmatpush1.msra.mxu0 %v156
    %167 = vmatprep.subr.mxu0 0.0
    %168 = vmatpush1.msra.mxu0 %v157
    %169 = vmatprep.subr.mxu0 0.0
    %170 = vmatpush1.msra.mxu0 %v158
    %171 = vmatprep.subr.mxu0 0.0
    %172 = vmatpush1.msra.mxu0 %v159
    %173 = vmatprep.subr.mxu0 0.0
    %174 = vmatpush1.msra.mxu0 %v160
    %175 = vmatprep.subr.mxu0 0.0
    %176 = vmatpush1.msra.mxu0 %v161
    %177 = vmatprep.subr.mxu0 0.0
    %178 = vmatpush1.msra.mxu0 %v162
    %179 = vmatprep.subr.mxu0 0.0
    %180 = vmatpush1.msra.mxu0 0.0
    %181 = vmatprep.subr.mxu0 0.0
    %182 = vmatpush1.msra.mxu0 0.0
    %183 = vmatprep.subr.mxu0 0.0
    %184 = vmatpush1.msra.mxu0 0.0
    %185 = vmatprep.subr.mxu0 0.0
    %186 = vmatpush1.msra.mxu0 0.0
    %187 = vmatprep.subr.mxu0 0.0
    %188 = vmatpush1.msra.mxu0 0.0
    %189 = vmatprep.subr.mxu0 0.0
    %190 = vmatpush1.msra.mxu0 0.0
    %191 = vmatprep.subr.mxu0 0.0
    %192 = vmatpush1.msra.mxu0 0.0
    %193 = vmatprep.subr.mxu0 0.0
    %194 = vmatpush1.msra.mxu0 0.0
    %195 = vmatprep.subr.mxu0 0.0
    %196 = vmatpush1.msra.mxu0 0.0
    %197 = vmatprep.subr.mxu0 0.0
    %198 = vmatpush1.msra.mxu0 0.0
    %199 = vmatprep.subr.mxu0 0.0
    %200 = vmatpush1.msra.mxu0 0.0
    %201 = vmatprep.subr.mxu0 0.0
    %202 = vmatpush1.msra.mxu0 0.0
    %203 = vmatprep.subr.mxu0 0.0
    %204 = vmatpush1.msra.mxu0 0.0
    %205 = vmatprep.subr.mxu0 0.0
    %206 = vmatpush1.msra.mxu0 0.0
    %207 = vmatprep.subr.mxu0 0.0
    %208 = vmatpush1.msra.mxu0 0.0
    %209 = vmatprep.subr.mxu0 0.0
    %210 = vmatpush1.msra.mxu0 0.0
    %211 = vmatprep.subr.mxu0 0.0
    %212 = vmatpush1.msra.mxu0 0.0
    %213 = vmatprep.subr.mxu0 0.0
    %214 = vmatpush1.msra.mxu0 0.0
    %215 = vmatprep.subr.mxu0 0.0
    %216 = vmatpush1.msra.mxu0 0.0
    %217 = vmatprep.subr.mxu0 0.0
    %218 = vmatpush1.msra.mxu0 0.0
    %219 = vmatprep.subr.mxu0 0.0
    %220 = vmatpush1.msra.mxu0 0.0
    %221 = vmatprep.subr.mxu0 0.0
    %222 = vmatpush1.msra.mxu0 0.0
    %223 = vmatprep.subr.mxu0 0.0
    %224 = vmatpush1.msra.mxu0 0.0
    %225 = vmatprep.subr.mxu0 0.0
    %226 = vmatpush1.msra.mxu0 0.0
    %227 = vmatprep.mubr.f32.mxu0 0.0
    %228 = vmatmul.mubr.f32.gmra.mrb[0].mxu0 %v83
    %v229 = vpop.f32.mrb[0].mxu0
    %v230 = vadd.f32 0.0, %v229
    %v231 = vpop.f32.mrb[0].mxu0
    %232 = vdwg.mxu0
    %v233 = vld [vmem:[%s3] sm:$0xff]
    %v234 = vld [vmem:[#allocation8] sm:$0xff]
    %vm235 = vcmask 64512
    %v237 = vsel %vm235, %v234, 0
    %239 = vmatprep.subr.mxu0 0.0
    %240 = vmatpush1.msra.mxu0 %v230
    %241 = vmatprep.subr.mxu0 0.0
    %242 = vmatpush1.msra.mxu0 0.0
    %243 = vmatprep.subr.mxu0 0.0
    %244 = vmatpush1.msra.mxu0 0.0
    %245 = vmatprep.subr.mxu0 0.0
    %246 = vmatpush1.msra.mxu0 0.0
    %247 = vmatprep.subr.mxu0 0.0
    %248 = vmatpush1.msra.mxu0 0.0
    %249 = vmatprep.subr.mxu0 0.0
    %250 = vmatpush1.msra.mxu0 0.0
    %251 = vmatprep.subr.mxu0 0.0
    %252 = vmatpush1.msra.mxu0 0.0
    %253 = vmatprep.subr.mxu0 0.0
    %254 = vmatpush1.msra.mxu0 0.0
    %255 = vmatprep.subr.mxu0 0.0
    %256 = vmatpush1.msra.mxu0 0.0
    %257 = vmatprep.subr.mxu0 0.0
    %258 = vmatpush1.msra.mxu0 0.0
    %259 = vmatprep.subr.mxu0 0.0
    %260 = vmatpush1.msra.mxu0 0.0
    %261 = vmatprep.subr.mxu0 0.0
    %262 = vmatpush1.msra.mxu0 0.0
    %263 = vmatprep.subr.mxu0 0.0
    %264 = vmatpush1.msra.mxu0 0.0
    %265 = vmatprep.subr.mxu0 0.0
    %266 = vmatpush1.msra.mxu0 0.0
    %267 = vmatprep.subr.mxu0 0.0
    %268 = vmatpush1.msra.mxu0 0.0
    %269 = vmatprep.subr.mxu0 0.0
    %270 = vmatpush1.msra.mxu0 0.0
    %271 = vmatprep.subr.mxu0 0.0
    %272 = vmatpush1.msra.mxu0 0.0
    %273 = vmatprep.subr.mxu0 0.0
    %274 = vmatpush1.msra.mxu0 0.0
    %275 = vmatprep.subr.mxu0 0.0
    %276 = vmatpush1.msra.mxu0 0.0
    %277 = vmatprep.subr.mxu0 0.0
    %278 = vmatpush1.msra.mxu0 0.0
    %279 = vmatprep.subr.mxu0 0.0
    %280 = vmatpush1.msra.mxu0 0.0
    %281 = vmatprep.subr.mxu0 0.0
    %282 = vmatpush1.msra.mxu0 0.0
    %283 = vmatprep.subr.mxu0 0.0
    %284 = vmatpush1.msra.mxu0 0.0
    %285 = vmatprep.subr.mxu0 0.0
    %286 = vmatpush1.msra.mxu0 0.0
    %287 = vmatprep.subr.mxu0 0.0
    %288 = vmatpush1.msra.mxu0 0.0
    %289 = vmatprep.subr.mxu0 0.0
    %290 = vmatpush1.msra.mxu0 0.0
    %291 = vmatprep.subr.mxu0 0.0
    %292 = vmatpush1.msra.mxu0 0.0
    %293 = vmatprep.subr.mxu0 0.0
    %294 = vmatpush1.msra.mxu0 0.0
    %295 = vmatprep.subr.mxu0 0.0
    %296 = vmatpush1.msra.mxu0 0.0
    %297 = vmatprep.subr.mxu0 0.0
    %298 = vmatpush1.msra.mxu0 0.0
    %299 = vmatprep.subr.mxu0 0.0
    %300 = vmatpush1.msra.mxu0 0.0
    %301 = vmatprep.subr.mxu0 0.0
    %302 = vmatpush1.msra.mxu0 0.0
    %303 = vmatprep.mubr.f32.mxu0 0.0
    %304 = vmatmul.mubr.f32.gmra.mrb[0].mxu0 %v237
    %v305 = vpop.f32.mrb[0].mxu0
    %v306 = vadd.f32 0.0, %v305
    %v307 = vpop.f32.mrb[0].mxu0
    %308 = vdwg.mxu0
    %v310 = vsel %vm235, %v233, 0
    %312 = vmatprep.subr.mxu0 0.0
    %313 = vmatpush1.msra.mxu0 %v152
    %314 = vmatprep.subr.mxu0 0.0
    %315 = vmatpush1.msra.mxu0 0.0
    %316 = vmatprep.subr.mxu0 0.0
    %317 = vmatpush1.msra.mxu0 0.0
    %318 = vmatprep.subr.mxu0 0.0
    %319 = vmatpush1.msra.mxu0 0.0
    %320 = vmatprep.subr.mxu0 0.0
    %321 = vmatpush1.msra.mxu0 0.0
    %322 = vmatprep.subr.mxu0 0.0
    %323 = vmatpush1.msra.mxu0 0.0
    %324 = vmatprep.subr.mxu0 0.0
    %325 = vmatpush1.msra.mxu0 0.0
    %326 = vmatprep.subr.mxu0 0.0
    %327 = vmatpush1.msra.mxu0 0.0
    %328 = vmatprep.subr.mxu0 0.0
    %329 = vmatpush1.msra.mxu0 0.0
    %330 = vmatprep.subr.mxu0 0.0
    %331 = vmatpush1.msra.mxu0 0.0
    %332 = vmatprep.subr.mxu0 0.0
    %333 = vmatpush1.msra.mxu0 0.0
    %334 = vmatprep.subr.mxu0 0.0
    %335 = vmatpush1.msra.mxu0 0.0
    %336 = vmatprep.subr.mxu0 0.0
    %337 = vmatpush1.msra.mxu0 0.0
    %338 = vmatprep.subr.mxu0 0.0
    %339 = vmatpush1.msra.mxu0 0.0
    %340 = vmatprep.subr.mxu0 0.0
    %341 = vmatpush1.msra.mxu0 0.0
    %342 = vmatprep.subr.mxu0 0.0
    %343 = vmatpush1.msra.mxu0 0.0
    %344 = vmatprep.subr.mxu0 0.0
    %345 = vmatpush1.msra.mxu0 0.0
    %346 = vmatprep.subr.mxu0 0.0
    %347 = vmatpush1.msra.mxu0 0.0
    %348 = vmatprep.subr.mxu0 0.0
    %349 = vmatpush1.msra.mxu0 0.0
    %350 = vmatprep.subr.mxu0 0.0
    %351 = vmatpush1.msra.mxu0 0.0
    %352 = vmatprep.subr.mxu0 0.0
    %353 = vmatpush1.msra.mxu0 0.0
    %354 = vmatprep.subr.mxu0 0.0
    %355 = vmatpush1.msra.mxu0 0.0
    %356 = vmatprep.subr.mxu0 0.0
    %357 = vmatpush1.msra.mxu0 0.0
    %358 = vmatprep.subr.mxu0 0.0
    %359 = vmatpush1.msra.mxu0 0.0
    %360 = vmatprep.subr.mxu0 0.0
    %361 = vmatpush1.msra.mxu0 0.0
    %362 = vmatprep.subr.mxu0 0.0
    %363 = vmatpush1.msra.mxu0 0.0
    %364 = vmatprep.subr.mxu0 0.0
    %365 = vmatpush1.msra.mxu0 0.0
    %366 = vmatprep.subr.mxu0 0.0
    %367 = vmatpush1.msra.mxu0 0.0
    %368 = vmatprep.subr.mxu0 0.0
    %369 = vmatpush1.msra.mxu0 0.0
    %370 = vmatprep.subr.mxu0 0.0
    %371 = vmatpush1.msra.mxu0 0.0
    %372 = vmatprep.subr.mxu0 0.0
    %373 = vmatpush1.msra.mxu0 0.0
    %374 = vmatprep.subr.mxu0 0.0
    %375 = vmatpush1.msra.mxu0 0.0
    %376 = vmatprep.mubr.f32.mxu0 0.0
    %377 = vmatmul.mubr.f32.gmra.mrb[0].mxu0 %v310
    %v378 = vpop.f32.mrb[0].mxu0
    %v379 = vadd.f32 %v306, %v378
    %v380 = vpop.f32.mrb[0].mxu0
    %381 = vdwg.mxu0
    %382 = vst [vmem:[#allocation10] sm:$0xff] %v379
    // Predicated region
    $region38: #{tpu_custom_call.1} parent=1 // pred_check
      _
    $region39: #{tpu_custom_call.1} parent=1 // pred_check_branch
      %384 = sbr.rel (0) target = $region41
    $region40: #{tpu_custom_call.1} parent=1 // pred_region
      %s386 = ssub.s32 128, 128
      %387 = vsyncadd [#allocation4], %s386
      %s389 = sshll.u32 [#allocation10], 4
      %s390 = int_to_ptr.vmem [resolvable:$true] %s389
      %392 = dma.vmem_to_hbm [thread:$0]  %s390, 128, %s5, [#allocation4]
    $region41: #{tpu_custom_call.1} parent=1 // pred_fallthru
      _
    // Predicated region
    $region42: #{tpu_custom_call.1} parent=1 // pred_check
      _
    $region43: #{tpu_custom_call.1} parent=1 // pred_check_branch
      %394 = sbr.rel (0) target = $region45
    $region44: #{tpu_custom_call.1} parent=1 // pred_region
      %395 = dma.done [#allocation4], 128
    $region45: #{tpu_custom_call.1} parent=1 // pred_fallthru
      _
    %396 = vsyncpa [#allocation3], 1
    %397 = vsyncpa [#allocation6], 1
    %398 = vsyncpa [#allocation9], 1
    %399 = vsyncpa [#allocation4], 1

</llo_original>
